<compile_context>
chip_gen: v6e
topology: v6e:2x2x1
jax: 0.10.0
libtpu: 0.0.40
codegen_flags: <defaults>
</compile_context>

<pallas_src>
import functools

import jax
import jax.numpy as jnp
from jax.experimental import pallas as pl
from jax.experimental.pallas import tpu as pltpu

NEG_SLOPE = 0.01   # nn.LeakyReLU default negative_slope
LANES = 128        # TPU lane width; hidden feature dims are padded to this


def _leaky_relu(x):
    return jnp.where(x > 0, x, NEG_SLOPE * x)


def _round_up(n, m):
    return ((n + m - 1) // m) * m


def mlp_kernel(x_ref, w1_ref, b1_ref, w2_ref, b2_ref, w3_ref, b3_ref, o_ref):
    # x_ref: (tb, 8)        w1_ref: (8, 128)    b1_ref: (1, 128)
    # w2_ref: (128, 128)    b2_ref: (1, 128)
    # w3_ref: (128, 100)    b3_ref: (1, 100)    o_ref: (tb, 100)
    # Padded rows/cols of the weights and biases are exactly zero, so the padded
    # hidden lanes stay zero through both LeakyReLU layers and the result is exact.
    h = jnp.dot(x_ref[...], w1_ref[...], preferred_element_type=jnp.float32)
    h = _leaky_relu(h + b1_ref[...])
    h = jnp.dot(h, w2_ref[...], preferred_element_type=jnp.float32)
    h = _leaky_relu(h + b2_ref[...])
    out = jnp.dot(h, w3_ref[...], preferred_element_type=jnp.float32)
    o_ref[...] = (out + b3_ref[...]).astype(o_ref.dtype)


def pack_params(params):
    """Pack per-layer (W(in,out), b(out,)) into lane-padded f32 arrays.

    Hidden-layer weights/biases are zero-padded on the hidden dim to 128 lanes;
    the output layer keeps its real width (100) so the kernel stores directly
    at the final shape.
    """
    w1, b1 = params["h1"]
    w2, b2 = params["h2"]
    w3, b3 = params["out"]
    in_dim, h1 = w1.shape
    h1b, h2 = w2.shape
    h2b, out_dim = w3.shape
    w1p = jnp.zeros((in_dim, LANES), jnp.float32).at[:, :h1].set(w1)
    b1p = jnp.zeros((1, LANES), jnp.float32).at[0, :h1].set(b1)
    w2p = jnp.zeros((LANES, LANES), jnp.float32).at[:h1b, :h2].set(w2)
    b2p = jnp.zeros((1, LANES), jnp.float32).at[0, :h2].set(b2)
    w3p = jnp.zeros((LANES, out_dim), jnp.float32).at[:h2b, :].set(w3)
    b3p = jnp.asarray(b3, jnp.float32).reshape(1, out_dim)
    return (w1p, b1p, w2p, b2p, w3p, b3p)


@functools.partial(jax.jit, static_argnames=("tile_b",))
def neural_net_forward(x, w1, b1, w2, b2, w3, b3, *, tile_b=2048):
    """x: (B, in_features) f32. Returns (B, out_dim) f32."""
    B, F = x.shape
    out_dim = w3.shape[1]

    # Batch tile: as large as tile_b (multiple of 8), but for big batches ensure
    # at least 2 grid tiles so the "parallel" axis shards across v7x's 2 TensorCores.
    tb = min(tile_b, _round_up(B, 8))
    if B > 2048:
        tb = min(tb, _round_up(pl.cdiv(B, 2), 8))
    num_tiles = pl.cdiv(B, tb)
    Bp = num_tiles * tb

    xp = x.astype(jnp.float32)
    if Bp != B:
        xp = jnp.zeros((Bp, F), jnp.float32).at[:B, :].set(xp)

    out = pl.pallas_call(
        mlp_kernel,
        out_shape=jax.ShapeDtypeStruct((Bp, out_dim), jnp.float32),
        grid=(num_tiles,),
        in_specs=[
            pl.BlockSpec((tb, F), lambda i: (i, 0)),            # x tile (8-lane, native)
            pl.BlockSpec((F, LANES), lambda i: (0, 0)),         # w1 (resident)
            pl.BlockSpec((1, LANES), lambda i: (0, 0)),         # b1
            pl.BlockSpec((LANES, LANES), lambda i: (0, 0)),     # w2
            pl.BlockSpec((1, LANES), lambda i: (0, 0)),         # b2
            pl.BlockSpec((LANES, out_dim), lambda i: (0, 0)),   # w3 (real 100-wide)
            pl.BlockSpec((1, out_dim), lambda i: (0, 0)),       # b3
        ],
        out_specs=pl.BlockSpec((tb, out_dim), lambda i: (i, 0)),
        compiler_params=pltpu.CompilerParams(
            dimension_semantics=("parallel",)),
    )(xp, w1, b1, w2, b2, w3, b3)

    return out if Bp == B else out[:B]


def init_params(key, hidden_neurons=(8, 8, 8), output_size=100):
    """Deterministic init mimicking PyTorch Linear (uniform +-1/sqrt(fan_in)).

    Weights are (in, out) (already transposed from PyTorch's (out, in)),
    biases are (out,).
    """
    dims = list(hidden_neurons) + [output_size]
    names = ["h1", "h2", "out"]
    params = {}
    for name, fan_in, fan_out in zip(names, dims[:-1], dims[1:]):
        key, kw, kb = jax.random.split(key, 3)
        bound = 1.0 / (fan_in ** 0.5)
        w = jax.random.uniform(kw, (fan_in, fan_out), jnp.float32, -bound, bound)
        b = jax.random.uniform(kb, (fan_out,), jnp.float32, -bound, bound)
        params[name] = (w, b)
    return params


def reference_forward(x, params):
    h = x
    for name in ("h1", "h2"):
        w, b = params[name]
        h = _leaky_relu(h @ w + b)
    w, b = params["out"]
    return h @ w + b


if __name__ == "__main__":
    key = jax.random.PRNGKey(0)
    key, kx = jax.random.split(key)

    batch = 8
    hidden_neurons = (8, 8, 8)
    output_size = 100

    params = init_params(key, hidden_neurons, output_size)
    packed = pack_params(params)
    x = jax.random.normal(kx, (batch, hidden_neurons[0]), jnp.float32)

    out = neural_net_forward(x, *packed)
    out = jax.block_until_ready(out)

    ref = reference_forward(x, params)
    assert out.shape == (batch, output_size), out.shape
    assert jnp.allclose(out, ref, atol=1e-5, rtol=1e-5), "mismatch vs reference"

    print("KERNEL_OK")
</pallas_src>

<mosaic_0001>
module attributes {stable_mosaic.version = 11 : i64} {
  func.func @mlp_kernel(%arg0: i32, %arg1: memref<8x8xf32, #tpu.memory_space<vmem>>, %arg2: memref<8x128xf32, #tpu.memory_space<vmem>>, %arg3: memref<1x128xf32, #tpu.memory_space<vmem>>, %arg4: memref<128x128xf32, #tpu.memory_space<vmem>>, %arg5: memref<1x128xf32, #tpu.memory_space<vmem>>, %arg6: memref<128x100xf32, #tpu.memory_space<vmem>>, %arg7: memref<1x100xf32, #tpu.memory_space<vmem>>, %arg8: memref<8x100xf32, #tpu.memory_space<vmem>>) attributes {dimension_semantics = [#tpu.dimension_semantics<parallel>], iteration_bounds = array<i64: 1>, scalar_prefetch = 0 : i64, scratch_operands = 0 : i64, tpu.core_type = #tpu.core_type<tc>, window_params = [{transform_indices = @transform_0, window_bounds = array<i64: 8, 8>}, {pipeline_mode = #tpu.pipeline_mode<synchronous>, transform_indices = @transform_1, window_bounds = array<i64: 8, 128>}, {pipeline_mode = #tpu.pipeline_mode<synchronous>, transform_indices = @transform_2, window_bounds = array<i64: 1, 128>}, {pipeline_mode = #tpu.pipeline_mode<synchronous>, transform_indices = @transform_3, window_bounds = array<i64: 128, 128>}, {pipeline_mode = #tpu.pipeline_mode<synchronous>, transform_indices = @transform_4, window_bounds = array<i64: 1, 128>}, {pipeline_mode = #tpu.pipeline_mode<synchronous>, transform_indices = @transform_5, window_bounds = array<i64: 128, 100>}, {pipeline_mode = #tpu.pipeline_mode<synchronous>, transform_indices = @transform_6, window_bounds = array<i64: 1, 100>}, {transform_indices = @transform_7, window_bounds = array<i64: 8, 100>}]} {
    %c0 = arith.constant 0 : index
    %c0_0 = arith.constant 0 : index
    %0 = vector.load %arg1[%c0, %c0_0] : memref<8x8xf32, #tpu.memory_space<vmem>>, vector<8x8xf32>
    %c0_1 = arith.constant 0 : index
    %c0_2 = arith.constant 0 : index
    %1 = vector.load %arg2[%c0_1, %c0_2] : memref<8x128xf32, #tpu.memory_space<vmem>>, vector<8x128xf32>
    %cst = arith.constant dense<0.000000e+00> : vector<8x128xf32>
    %2 = tpu.matmul %0, %1, %cst {dimension_numbers = #tpu.dot_dimension_numbers<[1], [0], [0], [1], [0, 0, 1, 1], [], []>} : vector<8x8xf32>, vector<8x128xf32>, vector<8x128xf32> -> vector<8x128xf32>
    %c0_3 = arith.constant 0 : index
    %c0_4 = arith.constant 0 : index
    %3 = vector.load %arg3[%c0_3, %c0_4] : memref<1x128xf32, #tpu.memory_space<vmem>>, vector<1x128xf32>
    %4 = vector.broadcast %3 : vector<1x128xf32> to vector<8x128xf32>
    %5 = arith.addf %2, %4 : vector<8x128xf32>
    %cst_5 = arith.constant 0.000000e+00 : f32
    %6 = vector.broadcast %cst_5 : f32 to vector<8x128xf32>
    %7 = arith.cmpf ogt, %5, %6 : vector<8x128xf32>
    %cst_6 = arith.constant 0.00999999977 : f32
    %8 = vector.broadcast %cst_6 : f32 to vector<8x128xf32>
    %9 = arith.mulf %8, %5 : vector<8x128xf32>
    %10 = arith.select %7, %5, %9 : vector<8x128xi1>, vector<8x128xf32>
    %c0_7 = arith.constant 0 : index
    %c0_8 = arith.constant 0 : index
    %11 = vector.load %arg4[%c0_7, %c0_8] : memref<128x128xf32, #tpu.memory_space<vmem>>, vector<128x128xf32>
    %cst_9 = arith.constant dense<0.000000e+00> : vector<8x128xf32>
    %12 = tpu.matmul %10, %11, %cst_9 {dimension_numbers = #tpu.dot_dimension_numbers<[1], [0], [0], [1], [0, 0, 1, 1], [], []>} : vector<8x128xf32>, vector<128x128xf32>, vector<8x128xf32> -> vector<8x128xf32>
    %c0_10 = arith.constant 0 : index
    %c0_11 = arith.constant 0 : index
    %13 = vector.load %arg5[%c0_10, %c0_11] : memref<1x128xf32, #tpu.memory_space<vmem>>, vector<1x128xf32>
    %14 = vector.broadcast %13 : vector<1x128xf32> to vector<8x128xf32>
    %15 = arith.addf %12, %14 : vector<8x128xf32>
    %cst_12 = arith.constant 0.000000e+00 : f32
    %16 = vector.broadcast %cst_12 : f32 to vector<8x128xf32>
    %17 = arith.cmpf ogt, %15, %16 : vector<8x128xf32>
    %cst_13 = arith.constant 0.00999999977 : f32
    %18 = vector.broadcast %cst_13 : f32 to vector<8x128xf32>
    %19 = arith.mulf %18, %15 : vector<8x128xf32>
    %20 = arith.select %17, %15, %19 : vector<8x128xi1>, vector<8x128xf32>
    %c0_14 = arith.constant 0 : index
    %c0_15 = arith.constant 0 : index
    %21 = vector.load %arg6[%c0_14, %c0_15] : memref<128x100xf32, #tpu.memory_space<vmem>>, vector<128x100xf32>
    %cst_16 = arith.constant dense<0.000000e+00> : vector<8x100xf32>
    %22 = tpu.matmul %20, %21, %cst_16 {dimension_numbers = #tpu.dot_dimension_numbers<[1], [0], [0], [1], [0, 0, 1, 1], [], []>} : vector<8x128xf32>, vector<128x100xf32>, vector<8x100xf32> -> vector<8x100xf32>
    %c0_17 = arith.constant 0 : index
    %c0_18 = arith.constant 0 : index
    %23 = vector.load %arg7[%c0_17, %c0_18] : memref<1x100xf32, #tpu.memory_space<vmem>>, vector<1x100xf32>
    %24 = vector.broadcast %23 : vector<1x100xf32> to vector<8x100xf32>
    %25 = arith.addf %22, %24 : vector<8x100xf32>
    %c0_19 = arith.constant 0 : index
    %c0_20 = arith.constant 0 : index
    %26 = vector.load %arg8[%c0_19, %c0_20] : memref<8x100xf32, #tpu.memory_space<vmem>>, vector<8x100xf32>
    tpu.vector_store %arg8[%c0_19, %c0_20], %25 {strides = array<i32>} : memref<8x100xf32, #tpu.memory_space<vmem>>, vector<8x100xf32>,
    return
  }
  func.func @transform_0(%arg0: i32) -> (i32, i32) {
    %c0_i32 = arith.constant 0 : i32
    %c0_i32_0 = arith.constant 0 : i32
    return %arg0, %c0_i32 : i32, i32
  }
  func.func @transform_1(%arg0: i32) -> (i32, i32) {
    %c0_i32 = arith.constant 0 : i32
    %c0_i32_0 = arith.constant 0 : i32
    %c0_i32_1 = arith.constant 0 : i32
    return %c0_i32, %c0_i32_0 : i32, i32
  }
  func.func @transform_2(%arg0: i32) -> (i32, i32) {
    %c0_i32 = arith.constant 0 : i32
    %c0_i32_0 = arith.constant 0 : i32
    %c0_i32_1 = arith.constant 0 : i32
    return %c0_i32, %c0_i32_0 : i32, i32
  }
  func.func @transform_3(%arg0: i32) -> (i32, i32) {
    %c0_i32 = arith.constant 0 : i32
    %c0_i32_0 = arith.constant 0 : i32
    %c0_i32_1 = arith.constant 0 : i32
    return %c0_i32, %c0_i32_0 : i32, i32
  }
  func.func @transform_4(%arg0: i32) -> (i32, i32) {
    %c0_i32 = arith.constant 0 : i32
    %c0_i32_0 = arith.constant 0 : i32
    %c0_i32_1 = arith.constant 0 : i32
    return %c0_i32, %c0_i32_0 : i32, i32
  }
  func.func @transform_5(%arg0: i32) -> (i32, i32) {
    %c0_i32 = arith.constant 0 : i32
    %c0_i32_0 = arith.constant 0 : i32
    %c0_i32_1 = arith.constant 0 : i32
    return %c0_i32, %c0_i32_0 : i32, i32
  }
  func.func @transform_6(%arg0: i32) -> (i32, i32) {
    %c0_i32 = arith.constant 0 : i32
    %c0_i32_0 = arith.constant 0 : i32
    %c0_i32_1 = arith.constant 0 : i32
    return %c0_i32, %c0_i32_0 : i32, i32
  }
  func.func @transform_7(%arg0: i32) -> (i32, i32) {
    %c0_i32 = arith.constant 0 : i32
    %c0_i32_0 = arith.constant 0 : i32
    return %arg0, %c0_i32 : i32, i32
  }
}

</mosaic_0001>

<llo_original>
// kernel: neural_net_forward.1
$region0: #{neural_net_forward.1}
  #allocation0 [shape = 'u32[]', space=smem, size = 0x4, offset = 0x4, fixed_abs, tag = 'smem constant byte address 0x4 - core index']
  #allocation1 [shape = 'u32[144,128]{1,0:T(1,128)}', space=vmem, size = 0x12000, scoped, tag = 'internal scratch']
  %s0 = inlined_call_operand.vmem [shape: f32[8,8], index: 0, kind: input, shape index: {}]
  %s1 = inlined_call_operand.vmem [shape: f32[8,128], index: 1, kind: input, shape index: {}]
  %s2 = inlined_call_operand.vmem [shape: f32[1,128], index: 2, kind: input, shape index: {}]
  %s3 = inlined_call_operand.vmem [shape: f32[128,128], index: 3, kind: input, shape index: {}]
  %s4 = inlined_call_operand.vmem [shape: f32[1,128], index: 4, kind: input, shape index: {}]
  %s5 = inlined_call_operand.vmem [shape: f32[128,100], index: 5, kind: input, shape index: {}]
  %s6 = inlined_call_operand.vmem [shape: f32[1,100], index: 6, kind: input, shape index: {}]
  %s7 = inlined_call_operand.hbm [shape: f32[8,100], index: 7, kind: output, shape index: {}]
  %s8 = sld [smem:[#allocation0]]
  $region38: #{neural_net_forward.1} parent=0
    _
  %s10 = ssub.s32 1, %s8
  %s11 = scalar_select 0, %s10, %s8
  $region1: #{neural_net_forward.1} parent=0
    #allocation2 [shape = 'u8[4096]{0}', space=vmem, size = 0x1000, scoped, tag = 'output window, operand 0, single buffered']
    #allocation3 [shape = 's32[1]{0}', space=sflag, size = 0x4, scoped, tag = 'scoped memory for neural_net_forward.1']
    %12 = vsyncpa [#allocation3], 0
    // Predicated region
    $region2: #{neural_net_forward.1} parent=1 // pred_check
      _
    $region3: #{neural_net_forward.1} parent=1 // pred_check_branch
      %14 = sbr.rel (0) target = $region5
    $region4: #{neural_net_forward.1} parent=1 // pred_region
      _
    $region5: #{neural_net_forward.1} parent=1 // pred_fallthru
      _
    // Predicated region
    $region6: #{neural_net_forward.1} parent=1 // pred_check
      _
    $region7: #{neural_net_forward.1} parent=1 // pred_check_branch
      %16 = sbr.rel (0) target = $region9
    $region8: #{neural_net_forward.1} parent=1 // pred_region
      _
    $region9: #{neural_net_forward.1} parent=1 // pred_fallthru
      _
    // Predicated region
    $region10: #{neural_net_forward.1} parent=1 // pred_check
      _
    $region11: #{neural_net_forward.1} parent=1 // pred_check_branch
      %18 = sbr.rel (0) target = $region13
    $region12: #{neural_net_forward.1} parent=1 // pred_region
      _
    $region13: #{neural_net_forward.1} parent=1 // pred_fallthru
      _
    // Predicated region
    $region14: #{neural_net_forward.1} parent=1 // pred_check
      _
    $region15: #{neural_net_forward.1} parent=1 // pred_check_branch
      %20 = sbr.rel (0) target = $region17
    $region16: #{neural_net_forward.1} parent=1 // pred_region
      _
    $region17: #{neural_net_forward.1} parent=1 // pred_fallthru
      _
    // Predicated region
    $region18: #{neural_net_forward.1} parent=1 // pred_check
      _
    $region19: #{neural_net_forward.1} parent=1 // pred_check_branch
      %22 = sbr.rel (0) target = $region21
    $region20: #{neural_net_forward.1} parent=1 // pred_region
      _
    $region21: #{neural_net_forward.1} parent=1 // pred_fallthru
      _
    // Predicated region
    $region22: #{neural_net_forward.1} parent=1 // pred_check
      _
    $region23: #{neural_net_forward.1} parent=1 // pred_check_branch
      %24 = sbr.rel (0) target = $region25
    $region24: #{neural_net_forward.1} parent=1 // pred_region
      _
    $region25: #{neural_net_forward.1} parent=1 // pred_fallthru
      _
    // Predicated region
    $region26: #{neural_net_forward.1} parent=1 // pred_check
      _
    $region27: #{neural_net_forward.1} parent=1 // pred_check_branch
      %26 = sbr.rel (0) target = $region29
    $region28: #{neural_net_forward.1} parent=1 // pred_region
      _
    $region29: #{neural_net_forward.1} parent=1 // pred_fallthru
      _
    %v27 = vld [vmem:[%s0] sm:$0xff]
    %v28 = vld [vmem:[%s1] sm:$0xff]
    %v29 = vld [vmem:[%s2] sm:$0x1]
    %v31 = vlaneseq
    %v32 = vshrl.u32 %v31, 7
    %v33 = vsub.s32 0, %v32
    %v34 = vrot.slane %v29, %v33
    %vm36 = vcmask 64512
    %v38 = vsel %vm36, %v27, 0
    %40 = vmatprep.subr.mxu0 0.0
    %41 = vmatpush1.msra.mxu0 0.0
    %42 = vmatprep.subr.mxu0 0.0
    %43 = vmatpush1.msra.mxu0 0.0
    %44 = vmatprep.subr.mxu0 0.0
    %45 = vmatpush1.msra.mxu0 0.0
    %46 = vmatprep.subr.mxu0 0.0
    %47 = vmatpush1.msra.mxu0 0.0
    %48 = vmatprep.subr.mxu0 0.0
    %49 = vmatpush1.msra.mxu0 0.0
    %50 = vmatprep.subr.mxu0 0.0
    %51 = vmatpush1.msra.mxu0 0.0
    %52 = vmatprep.subr.mxu0 0.0
    %53 = vmatpush1.msra.mxu0 0.0
    %54 = vmatprep.subr.mxu0 0.0
    %55 = vmatpush1.msra.mxu0 0.0
    %56 = vmatprep.subr.mxu0 0.0
    %57 = vmatpush1.msra.mxu0 0.0
    %58 = vmatprep.subr.mxu0 0.0
    %59 = vmatpush1.msra.mxu0 0.0
    %60 = vmatprep.subr.mxu0 0.0
    %61 = vmatpush1.msra.mxu0 0.0
    %62 = vmatprep.subr.mxu0 0.0
    %63 = vmatpush1.msra.mxu0 0.0
    %64 = vmatprep.subr.mxu0 0.0
    %65 = vmatpush1.msra.mxu0 0.0
    %66 = vmatprep.subr.mxu0 0.0
    %67 = vmatpush1.msra.mxu0 0.0
    %68 = vmatprep.subr.mxu0 0.0
    %69 = vmatpush1.msra.mxu0 0.0
    %70 = vmatprep.subr.mxu0 0.0
    %71 = vmatpush1.msra.mxu0 %v28
    %72 = vmatprep.subr.mxu0 0.0
    %73 = vmatpush2.msra.mxu0 0.0
    %74 = vmatprep.subr.mxu0 0.0
    %75 = vmatpush2.msra.mxu0 0.0
    %76 = vmatprep.subr.mxu0 0.0
    %77 = vmatpush2.msra.mxu0 0.0
    %78 = vmatprep.subr.mxu0 0.0
    %79 = vmatpush2.msra.mxu0 0.0
    %80 = vmatprep.subr.mxu0 0.0
    %81 = vmatpush2.msra.mxu0 0.0
    %82 = vmatprep.subr.mxu0 0.0
    %83 = vmatpush2.msra.mxu0 0.0
    %84 = vmatprep.subr.mxu0 0.0
    %85 = vmatpush2.msra.mxu0 0.0
    %86 = vmatprep.subr.mxu0 0.0
    %87 = vmatpush2.msra.mxu0 0.0
    %88 = vmatprep.subr.mxu0 0.0
    %89 = vmatpush2.msra.mxu0 0.0
    %90 = vmatprep.subr.mxu0 0.0
    %91 = vmatpush2.msra.mxu0 0.0
    %92 = vmatprep.subr.mxu0 0.0
    %93 = vmatpush2.msra.mxu0 0.0
    %94 = vmatprep.subr.mxu0 0.0
    %95 = vmatpush2.msra.mxu0 0.0
    %96 = vmatprep.subr.mxu0 0.0
    %97 = vmatpush2.msra.mxu0 0.0
    %98 = vmatprep.subr.mxu0 0.0
    %99 = vmatpush2.msra.mxu0 0.0
    %100 = vmatprep.subr.mxu0 0.0
    %101 = vmatpush2.msra.mxu0 0.0
    %102 = vmatprep.subr.mxu0 0.0
    %103 = vmatpush2.msra.mxu0 0.0
    %104 = vmatprep.mubr.f32.mxu0 0.0
    %105 = vmatmul.mubr.f32.gmra.mxu0 %v38
    %v106 = vpop.f32.mrf.mxu0
    %v107 = vadd.f32 %v34, %v106
    %v108 = vpop.f32.mrf.mxu0
    %109 = vdwg.mxu0
    %vm110 = vcmp.gt.f32.partialorder %v107, 0.0
    %v111 = vmul.f32 %v107, 0.01
    %v112 = vsel %vm110, %v107, %v111
    %v113 = vld [vmem:[%s3] sm:$0xff]
    %v114 = vld [vmem:[%s3 + $0x8] sm:$0xff]
    %v115 = vld [vmem:[%s3 + $0x10] sm:$0xff]
    %v116 = vld [vmem:[%s3 + $0x18] sm:$0xff]
    %v117 = vld [vmem:[%s3 + $0x20] sm:$0xff]
    %v118 = vld [vmem:[%s3 + $0x28] sm:$0xff]
    %v119 = vld [vmem:[%s3 + $0x30] sm:$0xff]
    %v120 = vld [vmem:[%s3 + $0x38] sm:$0xff]
    %v121 = vld [vmem:[%s3 + $0x40] sm:$0xff]
    %v122 = vld [vmem:[%s3 + $0x48] sm:$0xff]
    %v123 = vld [vmem:[%s3 + $0x50] sm:$0xff]
    %v124 = vld [vmem:[%s3 + $0x58] sm:$0xff]
    %v125 = vld [vmem:[%s3 + $0x60] sm:$0xff]
    %v126 = vld [vmem:[%s3 + $0x68] sm:$0xff]
    %v127 = vld [vmem:[%s3 + $0x70] sm:$0xff]
    %v128 = vld [vmem:[%s3 + $0x78] sm:$0xff]
    %v129 = vld [vmem:[%s4] sm:$0x1]
    %v131 = vlaneseq
    %v132 = vshrl.u32 %v131, 7
    %v133 = vsub.s32 0, %v132
    %v134 = vrot.slane %v129, %v133
    %136 = vmatprep.subr.mxu0 0.0
    %137 = vmatpush1.msra.mxu0 %v128
    %138 = vmatprep.subr.mxu0 0.0
    %139 = vmatpush1.msra.mxu0 %v127
    %140 = vmatprep.subr.mxu0 0.0
    %141 = vmatpush1.msra.mxu0 %v126
    %142 = vmatprep.subr.mxu0 0.0
    %143 = vmatpush1.msra.mxu0 %v125
    %144 = vmatprep.subr.mxu0 0.0
    %145 = vmatpush1.msra.mxu0 %v124
    %146 = vmatprep.subr.mxu0 0.0
    %147 = vmatpush1.msra.mxu0 %v123
    %148 = vmatprep.subr.mxu0 0.0
    %149 = vmatpush1.msra.mxu0 %v122
    %150 = vmatprep.subr.mxu0 0.0
    %151 = vmatpush1.msra.mxu0 %v121
    %152 = vmatprep.subr.mxu0 0.0
    %153 = vmatpush1.msra.mxu0 %v120
    %154 = vmatprep.subr.mxu0 0.0
    %155 = vmatpush1.msra.mxu0 %v119
    %156 = vmatprep.subr.mxu0 0.0
    %157 = vmatpush1.msra.mxu0 %v118
    %158 = vmatprep.subr.mxu0 0.0
    %159 = vmatpush1.msra.mxu0 %v117
    %160 = vmatprep.subr.mxu0 0.0
    %161 = vmatpush1.msra.mxu0 %v116
    %162 = vmatprep.subr.mxu0 0.0
    %163 = vmatpush1.msra.mxu0 %v115
    %164 = vmatprep.subr.mxu0 0.0
    %165 = vmatpush1.msra.mxu0 %v114
    %166 = vmatprep.subr.mxu0 0.0
    %167 = vmatpush1.msra.mxu0 %v113
    %168 = vmatprep.subr.mxu0 0.0
    %169 = vmatpush2.msra.mxu0 0.0
    %170 = vmatprep.subr.mxu0 0.0
    %171 = vmatpush2.msra.mxu0 0.0
    %172 = vmatprep.subr.mxu0 0.0
    %173 = vmatpush2.msra.mxu0 0.0
    %174 = vmatprep.subr.mxu0 0.0
    %175 = vmatpush2.msra.mxu0 0.0
    %176 = vmatprep.subr.mxu0 0.0
    %177 = vmatpush2.msra.mxu0 0.0
    %178 = vmatprep.subr.mxu0 0.0
    %179 = vmatpush2.msra.mxu0 0.0
    %180 = vmatprep.subr.mxu0 0.0
    %181 = vmatpush2.msra.mxu0 0.0
    %182 = vmatprep.subr.mxu0 0.0
    %183 = vmatpush2.msra.mxu0 0.0
    %184 = vmatprep.subr.mxu0 0.0
    %185 = vmatpush2.msra.mxu0 0.0
    %186 = vmatprep.subr.mxu0 0.0
    %187 = vmatpush2.msra.mxu0 0.0
    %188 = vmatprep.subr.mxu0 0.0
    %189 = vmatpush2.msra.mxu0 0.0
    %190 = vmatprep.subr.mxu0 0.0
    %191 = vmatpush2.msra.mxu0 0.0
    %192 = vmatprep.subr.mxu0 0.0
    %193 = vmatpush2.msra.mxu0 0.0
    %194 = vmatprep.subr.mxu0 0.0
    %195 = vmatpush2.msra.mxu0 0.0
    %196 = vmatprep.subr.mxu0 0.0
    %197 = vmatpush2.msra.mxu0 0.0
    %198 = vmatprep.subr.mxu0 0.0
    %199 = vmatpush2.msra.mxu0 0.0
    %200 = vmatprep.mubr.f32.mxu0 0.0
    %201 = vmatmul.mubr.f32.gmra.mxu0 %v112
    %v202 = vpop.f32.mrf.mxu0
    %v203 = vadd.f32 %v134, %v202
    %v204 = vpop.f32.mrf.mxu0
    %205 = vdwg.mxu0
    %vm206 = vcmp.gt.f32.partialorder %v203, 0.0
    %v207 = vmul.f32 %v203, 0.01
    %v208 = vsel %vm206, %v203, %v207
    %v209 = vld [vmem:[%s5] sm:$0xff]
    %v210 = vld [vmem:[%s5 + $0x8] sm:$0xff]
    %v211 = vld [vmem:[%s5 + $0x10] sm:$0xff]
    %v212 = vld [vmem:[%s5 + $0x18] sm:$0xff]
    %v213 = vld [vmem:[%s5 + $0x20] sm:$0xff]
    %v214 = vld [vmem:[%s5 + $0x28] sm:$0xff]
    %v215 = vld [vmem:[%s5 + $0x30] sm:$0xff]
    %v216 = vld [vmem:[%s5 + $0x38] sm:$0xff]
    %v217 = vld [vmem:[%s5 + $0x40] sm:$0xff]
    %v218 = vld [vmem:[%s5 + $0x48] sm:$0xff]
    %v219 = vld [vmem:[%s5 + $0x50] sm:$0xff]
    %v220 = vld [vmem:[%s5 + $0x58] sm:$0xff]
    %v221 = vld [vmem:[%s5 + $0x60] sm:$0xff]
    %v222 = vld [vmem:[%s5 + $0x68] sm:$0xff]
    %v223 = vld [vmem:[%s5 + $0x70] sm:$0xff]
    %v224 = vld [vmem:[%s5 + $0x78] sm:$0xff]
    %v225 = vld [vmem:[%s6] sm:$0x1]
    %v227 = vlaneseq
    %v228 = vshrl.u32 %v227, 7
    %v229 = vsub.s32 0, %v228
    %v230 = vrot.slane %v225, %v229
    %232 = vmatprep.subr.mxu0 0.0
    %233 = vmatpush1.msra.mxu0 %v224
    %234 = vmatprep.subr.mxu0 0.0
    %235 = vmatpush1.msra.mxu0 %v223
    %236 = vmatprep.subr.mxu0 0.0
    %237 = vmatpush1.msra.mxu0 %v222
    %238 = vmatprep.subr.mxu0 0.0
    %239 = vmatpush1.msra.mxu0 %v221
    %240 = vmatprep.subr.mxu0 0.0
    %241 = vmatpush1.msra.mxu0 %v220
    %242 = vmatprep.subr.mxu0 0.0
    %243 = vmatpush1.msra.mxu0 %v219
    %244 = vmatprep.subr.mxu0 0.0
    %245 = vmatpush1.msra.mxu0 %v218
    %246 = vmatprep.subr.mxu0 0.0
    %247 = vmatpush1.msra.mxu0 %v217
    %248 = vmatprep.subr.mxu0 0.0
    %249 = vmatpush1.msra.mxu0 %v216
    %250 = vmatprep.subr.mxu0 0.0
    %251 = vmatpush1.msra.mxu0 %v215
    %252 = vmatprep.subr.mxu0 0.0
    %253 = vmatpush1.msra.mxu0 %v214
    %254 = vmatprep.subr.mxu0 0.0
    %255 = vmatpush1.msra.mxu0 %v213
    %256 = vmatprep.subr.mxu0 0.0
    %257 = vmatpush1.msra.mxu0 %v212
    %258 = vmatprep.subr.mxu0 0.0
    %259 = vmatpush1.msra.mxu0 %v211
    %260 = vmatprep.subr.mxu0 0.0
    %261 = vmatpush1.msra.mxu0 %v210
    %262 = vmatprep.subr.mxu0 0.0
    %263 = vmatpush1.msra.mxu0 %v209
    %264 = vmatprep.subr.mxu0 0.0
    %265 = vmatpush2.msra.mxu0 0.0
    %266 = vmatprep.subr.mxu0 0.0
    %267 = vmatpush2.msra.mxu0 0.0
    %268 = vmatprep.subr.mxu0 0.0
    %269 = vmatpush2.msra.mxu0 0.0
    %270 = vmatprep.subr.mxu0 0.0
    %271 = vmatpush2.msra.mxu0 0.0
    %272 = vmatprep.subr.mxu0 0.0
    %273 = vmatpush2.msra.mxu0 0.0
    %274 = vmatprep.subr.mxu0 0.0
    %275 = vmatpush2.msra.mxu0 0.0
    %276 = vmatprep.subr.mxu0 0.0
    %277 = vmatpush2.msra.mxu0 0.0
    %278 = vmatprep.subr.mxu0 0.0
    %279 = vmatpush2.msra.mxu0 0.0
    %280 = vmatprep.subr.mxu0 0.0
    %281 = vmatpush2.msra.mxu0 0.0
    %282 = vmatprep.subr.mxu0 0.0
    %283 = vmatpush2.msra.mxu0 0.0
    %284 = vmatprep.subr.mxu0 0.0
    %285 = vmatpush2.msra.mxu0 0.0
    %286 = vmatprep.subr.mxu0 0.0
    %287 = vmatpush2.msra.mxu0 0.0
    %288 = vmatprep.subr.mxu0 0.0
    %289 = vmatpush2.msra.mxu0 0.0
    %290 = vmatprep.subr.mxu0 0.0
    %291 = vmatpush2.msra.mxu0 0.0
    %292 = vmatprep.subr.mxu0 0.0
    %293 = vmatpush2.msra.mxu0 0.0
    %294 = vmatprep.subr.mxu0 0.0
    %295 = vmatpush2.msra.mxu0 0.0
    %296 = vmatprep.mubr.f32.mxu0 0.0
    %297 = vmatmul.mubr.f32.gmra.mxu0 %v208
    %v298 = vpop.f32.mrf.mxu0
    %v299 = vadd.f32 %v230, %v298
    %v300 = vpop.f32.mrf.mxu0
    %301 = vdwg.mxu0
    %vm302 = vcmask 818176
    %303 = vst.msk [vmem:[#allocation2] sm:$0xff] %vm302, %v299
    // Predicated region
    $region30: #{neural_net_forward.1} parent=1 // pred_check
      _
    $region31: #{neural_net_forward.1} parent=1 // pred_check_branch
      %305 = sbr.rel (0) target = $region33
    $region32: #{neural_net_forward.1} parent=1 // pred_region
      %s307 = ssub.s32 128, 128
      %308 = vsyncadd [#allocation3], %s307
      %s310 = sshll.u32 [#allocation2], 4
      %s311 = int_to_ptr.vmem [resolvable:$true] %s310
      %313 = dma.vmem_to_hbm [thread:$0]  %s311, 128, %s7, [#allocation3]
    $region33: #{neural_net_forward.1} parent=1 // pred_fallthru
      _
    // Predicated region
    $region34: #{neural_net_forward.1} parent=1 // pred_check
      _
    $region35: #{neural_net_forward.1} parent=1 // pred_check_branch
      %315 = sbr.rel (0) target = $region37
    $region36: #{neural_net_forward.1} parent=1 // pred_region
      %316 = dma.done [#allocation3], 128
    $region37: #{neural_net_forward.1} parent=1 // pred_fallthru
      _
    %317 = vsyncpa [#allocation3], 1

</llo_original>
